<compile_context>
chip_gen: v5e
topology: v5e:2x2
jax: 0.10.0
libtpu: 0.0.40
codegen_flags: <defaults>
</compile_context>

<pallas_src>
import jax
import jax.numpy as jnp
from jax.experimental import pallas as pl
from jax.experimental.pallas import tpu as pltpu

BN_EPS = 1e-5


def _round_up(x, m):
    return ((x + m - 1) // m) * m


def value_head_kernel(x_ref, weff_ref, w1_ref, b1_ref, w2_ref, b2_ref,
                      w3_ref, misc_ref, out_ref):
    # x_ref:    (TILE_B, C*64)   flattened NCHW block, native dtype (f32 or bf16)
    # weff_ref: (C*64, 64)       conv1x1 weight with BN scale folded in (block-diag)
    # w1/b1:    (64, 256) / (1, 256)
    # w2/b2:    (256, 128) / (1, 128)
    # w3:       (1, 128)         fc3 weight as a row (VPU mul + lane reduce)
    # misc:     (2,) SMEM        [bn_shift, fc3_bias]
    # out_ref:  (TILE_B, 1)
    shift = misc_ref[0]
    b3 = misc_ref[1]

    # conv1x1 + BatchNorm (eval) folded into one MXU matmul + scalar shift.
    # Keep x in its native dtype (bf16 MXU path when applicable), accumulate f32.
    x = x_ref[...]
    h = jnp.dot(x, weff_ref[...], preferred_element_type=jnp.float32) + shift
    h = jnp.maximum(h, 0.0)                                   # relu1, (TILE_B, 64)

    # fc1 -> relu2
    h1 = jnp.dot(h, w1_ref[...], preferred_element_type=jnp.float32) + b1_ref[...]
    h1 = jnp.maximum(h1, 0.0)                                 # (TILE_B, 256)

    # TODO(synk): Dropout(p=0.1) is a no-op at inference; training-mode masking not implemented.

    # fc2 -> relu3
    h2 = jnp.dot(h1, w2_ref[...], preferred_element_type=jnp.float32) + b2_ref[...]
    h2 = jnp.maximum(h2, 0.0)                                 # (TILE_B, 128)

    # fc3 (128 -> 1) as VPU multiply + lane reduce (avoids N=1 MXU matmul)
    out = jnp.sum(h2 * w3_ref[...], axis=-1, keepdims=True) + b3
    out_ref[...] = jnp.tanh(out)                              # (TILE_B, 1)


def value_head(x_nchw, params, *, tile_b=None, vmem_limit_bytes=32 * 1024 * 1024):
    """Fused ValueHead forward.  x_nchw: (B, C, 8, 8), any float dtype."""
    B, C, H, W = x_nchw.shape
    S = H * W
    assert S == 64, "fc1 expects 64 features -> spatial must be 8x8"

    (wconv, b_conv, gamma, beta, mean, var, w1, b1, w2, b2, w3, b3) = params
    f32 = jnp.float32

    # --- host-side folding of conv bias + BatchNorm into the conv weight ---
    bn_scale = gamma.astype(f32) * jax.lax.rsqrt(var.astype(f32) + BN_EPS)
    shift = beta.astype(f32) + (b_conv.astype(f32) - mean.astype(f32)) * bn_scale
    wc_eff = wconv.astype(f32) * bn_scale                            # (C,)
    # block-diagonal effective weight: W_eff[c*64+s, s'] = wc_eff[c] * (s == s')
    w_eff = (wc_eff[:, None, None] * jnp.eye(S, dtype=f32)).reshape(C * S, S)
    # match x dtype so the conv matmul runs on the fast MXU path for bf16 inputs
    w_eff = w_eff.astype(x_nchw.dtype)

    w1f = w1.astype(f32)
    b1f = b1.astype(f32).reshape(1, -1)
    w2f = w2.astype(f32)
    b2f = b2.astype(f32).reshape(1, -1)
    w3r = w3.astype(f32).reshape(1, -1)                              # (1, 128)
    misc = jnp.stack([shift, b3.astype(f32)])                        # (2,) -> SMEM

    # Free reshape (NCHW is contiguous); matches torch's x.view(B, -1) ordering.
    # The x DMA keeps the caller's dtype (bf16 halves HBM traffic on the only
    # large tensor).
    x_flat = x_nchw.reshape(B, C * S)

    # --- batch tiling: size TILE_B so 2x double-buffered x tiles fit VMEM ---
    row_bytes = C * S * x_flat.dtype.itemsize
    if tile_b is None:
        budget = 8 * 1024 * 1024        # per x tile (x2 buffers + weights < 32 MiB)
        tile_b = (budget // row_bytes) // 8 * 8
        tile_b = max(8, min(512, tile_b))
    tile_b = max(8, _round_up(tile_b, 8))
    tile_b = min(tile_b, _round_up(B, 8))

    # No host-side padding: Pallas masks the ragged last block.  Rows are
    # independent end-to-end, so stale data in the pad rows is harmless and
    # their output stores are dropped.
    grid = (pl.cdiv(B, tile_b),)

    F1 = w1f.shape[1]
    F2 = w2f.shape[1]
    flops = 2 * B * (C * S * S + S * F1 + F1 * F2 + F2)
    weight_bytes = (w_eff.size * w_eff.dtype.itemsize
                    + 4 * (w1f.size + b1f.size + w2f.size + b2f.size
                           + w3r.size + misc.size))
    bytes_accessed = B * row_bytes + weight_bytes + B * 4

    in_specs = [
        pl.BlockSpec((tile_b, C * S), lambda i: (i, 0)),       # x: batch-tiled
        pl.BlockSpec((C * S, S), lambda i: (0, 0)),            # weights: resident
        pl.BlockSpec((S, F1), lambda i: (0, 0)),
        pl.BlockSpec((1, F1), lambda i: (0, 0)),
        pl.BlockSpec((F1, F2), lambda i: (0, 0)),
        pl.BlockSpec((1, F2), lambda i: (0, 0)),
        pl.BlockSpec((1, F2), lambda i: (0, 0)),
        pl.BlockSpec(memory_space=pltpu.MemorySpace.SMEM),     # scalars
    ]
    out_specs = pl.BlockSpec((tile_b, 1), lambda i: (i, 0))

    out = pl.pallas_call(
        value_head_kernel,
        out_shape=jax.ShapeDtypeStruct((B, 1), jnp.float32),
        grid=grid,
        in_specs=in_specs,
        out_specs=out_specs,
        compiler_params=pltpu.CompilerParams(
            dimension_semantics=("parallel",),       # 2x on v7x's two TCs
            vmem_limit_bytes=vmem_limit_bytes,
        ),
        cost_estimate=pl.CostEstimate(
            flops=flops, transcendentals=B, bytes_accessed=bytes_accessed),
    )(x_flat, w_eff, w1f, b1f, w2f, b2f, w3r, misc)

    return out


def make_params(key, input_channels):
    ks = jax.random.split(key, 6)
    f32 = jnp.float32
    wconv = jax.random.normal(ks[0], (input_channels,), f32) * 0.2
    b_conv = jnp.asarray(0.05, f32)
    gamma = jnp.asarray(1.3, f32)
    beta = jnp.asarray(-0.1, f32)
    mean = jnp.asarray(0.02, f32)
    var = jnp.asarray(0.9, f32)
    w1 = jax.random.normal(ks[1], (64, 256), f32) * 0.1
    b1 = jax.random.normal(ks[2], (256,), f32) * 0.05
    w2 = jax.random.normal(ks[3], (256, 128), f32) * 0.1
    b2 = jax.random.normal(ks[4], (128,), f32) * 0.05
    w3 = jax.random.normal(ks[5], (128,), f32) * 0.1
    b3 = jnp.asarray(0.02, f32)
    return (wconv, b_conv, gamma, beta, mean, var, w1, b1, w2, b2, w3, b3)


def value_head_ref(x_nchw, params):
    """Pure-JAX reference mirroring the PyTorch forward (eval mode)."""
    (wconv, b_conv, gamma, beta, mean, var, w1, b1, w2, b2, w3, b3) = params
    x = x_nchw.astype(jnp.float32)
    hi = jax.lax.Precision.HIGHEST
    conv = jnp.einsum("bchw,c->bhw", x, wconv, precision=hi) + b_conv
    h = (conv - mean) * jax.lax.rsqrt(var + BN_EPS) * gamma + beta
    h = jnp.maximum(h, 0.0).reshape(x.shape[0], -1)            # (B, 64)
    h1 = jnp.maximum(jnp.dot(h, w1, precision=hi) + b1, 0.0)
    h2 = jnp.maximum(jnp.dot(h1, w2, precision=hi) + b2, 0.0)
    return jnp.tanh(jnp.dot(h2, w3.reshape(-1, 1), precision=hi) + b3)


if __name__ == "__main__":
    key = jax.random.PRNGKey(0)
    k_x1, k_p1, k_x2, k_p2 = jax.random.split(key, 4)

    # Case 1: tiny demo shapes (B=2, C=4, 8x8 spatial) -> single partial block.
    B, C, H, W = 2, 4, 8, 8
    x = jax.random.normal(k_x1, (B, C, H, W), jnp.float32)
    params = make_params(k_p1, C)
    out = jax.block_until_ready(value_head(x, params))
    ref = value_head_ref(x, params)
    assert out.shape == (B, 1)
    assert jnp.allclose(out, ref, atol=1e-3, rtol=1e-3), (out, ref)

    # Case 2: B not a multiple of 8, C >= 128 (exercises ragged tiling, no host pad).
    B2, C2 = 10, 128
    x2 = jax.random.normal(k_x2, (B2, C2, 8, 8), jnp.float32)
    params2 = make_params(k_p2, C2)
    out2 = jax.block_until_ready(value_head(x2, params2))
    ref2 = value_head_ref(x2, params2)
    assert out2.shape == (B2, 1)
    assert jnp.allclose(out2, ref2, atol=1e-3, rtol=1e-3), (out2, ref2)

    # Case 3: bf16 input (halved HBM traffic, bf16 MXU conv path), looser tolerance.
    out3 = jax.block_until_ready(value_head(x2.astype(jnp.bfloat16), params2))
    assert jnp.allclose(out3, ref2, atol=5e-2, rtol=5e-2), (out3, ref2)

    print("KERNEL_OK")
</pallas_src>

<mosaic_0001>
module attributes {stable_mosaic.version = 11 : i64} {
  func.func @value_head_kernel(%arg0: i32, %arg1: memref<8x256xf32, #tpu.memory_space<vmem>>, %arg2: memref<256x64xf32, #tpu.memory_space<vmem>>, %arg3: memref<64x256xf32, #tpu.memory_space<vmem>>, %arg4: memref<1x256xf32, #tpu.memory_space<vmem>>, %arg5: memref<256x128xf32, #tpu.memory_space<vmem>>, %arg6: memref<1x128xf32, #tpu.memory_space<vmem>>, %arg7: memref<1x128xf32, #tpu.memory_space<vmem>>, %arg8: memref<2xf32, #tpu.memory_space<smem>>, %arg9: memref<8x1xf32, #tpu.memory_space<vmem>>) attributes {dimension_semantics = [#tpu.dimension_semantics<parallel>], iteration_bounds = array<i64: 1>, scalar_prefetch = 0 : i64, scratch_operands = 0 : i64, tpu.core_type = #tpu.core_type<tc>, window_params = [{transform_indices = @transform_0, window_bounds = array<i64: 8, 256>}, {pipeline_mode = #tpu.pipeline_mode<synchronous>, transform_indices = @transform_1, window_bounds = array<i64: 256, 64>}, {pipeline_mode = #tpu.pipeline_mode<synchronous>, transform_indices = @transform_2, window_bounds = array<i64: 64, 256>}, {pipeline_mode = #tpu.pipeline_mode<synchronous>, transform_indices = @transform_3, window_bounds = array<i64: 1, 256>}, {pipeline_mode = #tpu.pipeline_mode<synchronous>, transform_indices = @transform_4, window_bounds = array<i64: 256, 128>}, {pipeline_mode = #tpu.pipeline_mode<synchronous>, transform_indices = @transform_5, window_bounds = array<i64: 1, 128>}, {pipeline_mode = #tpu.pipeline_mode<synchronous>, transform_indices = @transform_6, window_bounds = array<i64: 1, 128>}, {transform_indices = @transform_7, window_bounds = array<i64: 2>}, {transform_indices = @transform_8, window_bounds = array<i64: 8, 1>}]} {
    %c0 = arith.constant 0 : index
    %0 = memref.load %arg8[%c0] : memref<2xf32, #tpu.memory_space<smem>>
    %c1 = arith.constant 1 : index
    %1 = memref.load %arg8[%c1] : memref<2xf32, #tpu.memory_space<smem>>
    %c0_0 = arith.constant 0 : index
    %c0_1 = arith.constant 0 : index
    %2 = vector.load %arg1[%c0_0, %c0_1] : memref<8x256xf32, #tpu.memory_space<vmem>>, vector<8x256xf32>
    %c0_2 = arith.constant 0 : index
    %c0_3 = arith.constant 0 : index
    %3 = vector.load %arg2[%c0_2, %c0_3] : memref<256x64xf32, #tpu.memory_space<vmem>>, vector<256x64xf32>
    %cst = arith.constant dense<0.000000e+00> : vector<8x64xf32>
    %4 = tpu.matmul %2, %3, %cst {dimension_numbers = #tpu.dot_dimension_numbers<[1], [0], [0], [1], [0, 0, 1, 1], [], []>} : vector<8x256xf32>, vector<256x64xf32>, vector<8x64xf32> -> vector<8x64xf32>
    %5 = vector.broadcast %0 : f32 to vector<8x64xf32>
    %6 = arith.addf %4, %5 : vector<8x64xf32>
    %cst_4 = arith.constant 0.000000e+00 : f32
    %7 = vector.broadcast %cst_4 : f32 to vector<8x64xf32>
    %8 = arith.maximumf %6, %7 : vector<8x64xf32>
    %c0_5 = arith.constant 0 : index
    %c0_6 = arith.constant 0 : index
    %9 = vector.load %arg3[%c0_5, %c0_6] : memref<64x256xf32, #tpu.memory_space<vmem>>, vector<64x256xf32>
    %cst_7 = arith.constant dense<0.000000e+00> : vector<8x256xf32>
    %10 = tpu.matmul %8, %9, %cst_7 {dimension_numbers = #tpu.dot_dimension_numbers<[1], [0], [0], [1], [0, 0, 1, 1], [], []>} : vector<8x64xf32>, vector<64x256xf32>, vector<8x256xf32> -> vector<8x256xf32>
    %c0_8 = arith.constant 0 : index
    %c0_9 = arith.constant 0 : index
    %11 = vector.load %arg4[%c0_8, %c0_9] : memref<1x256xf32, #tpu.memory_space<vmem>>, vector<1x256xf32>
    %12 = vector.broadcast %11 : vector<1x256xf32> to vector<8x256xf32>
    %13 = arith.addf %10, %12 : vector<8x256xf32>
    %cst_10 = arith.constant 0.000000e+00 : f32
    %14 = vector.broadcast %cst_10 : f32 to vector<8x256xf32>
    %15 = arith.maximumf %13, %14 : vector<8x256xf32>
    %c0_11 = arith.constant 0 : index
    %c0_12 = arith.constant 0 : index
    %16 = vector.load %arg5[%c0_11, %c0_12] : memref<256x128xf32, #tpu.memory_space<vmem>>, vector<256x128xf32>
    %cst_13 = arith.constant dense<0.000000e+00> : vector<8x128xf32>
    %17 = tpu.matmul %15, %16, %cst_13 {dimension_numbers = #tpu.dot_dimension_numbers<[1], [0], [0], [1], [0, 0, 1, 1], [], []>} : vector<8x256xf32>, vector<256x128xf32>, vector<8x128xf32> -> vector<8x128xf32>
    %c0_14 = arith.constant 0 : index
    %c0_15 = arith.constant 0 : index
    %18 = vector.load %arg6[%c0_14, %c0_15] : memref<1x128xf32, #tpu.memory_space<vmem>>, vector<1x128xf32>
    %19 = vector.broadcast %18 : vector<1x128xf32> to vector<8x128xf32>
    %20 = arith.addf %17, %19 : vector<8x128xf32>
    %cst_16 = arith.constant 0.000000e+00 : f32
    %21 = vector.broadcast %cst_16 : f32 to vector<8x128xf32>
    %22 = arith.maximumf %20, %21 : vector<8x128xf32>
    %c0_17 = arith.constant 0 : index
    %c0_18 = arith.constant 0 : index
    %23 = vector.load %arg7[%c0_17, %c0_18] : memref<1x128xf32, #tpu.memory_space<vmem>>, vector<1x128xf32>
    %24 = vector.broadcast %23 : vector<1x128xf32> to vector<8x128xf32>
    %25 = arith.mulf %22, %24 : vector<8x128xf32>
    %cst_19 = arith.constant dense<0.000000e+00> : vector<8xf32>
    %26 = vector.multi_reduction <add>, %25, %cst_19 [1] : vector<8x128xf32> to vector<8xf32>
    %27 = vector.shape_cast %26 : vector<8xf32> to vector<8x1xf32>
    %28 = vector.broadcast %1 : f32 to vector<8x1xf32>
    %29 = arith.addf %27, %28 : vector<8x1xf32>
    %30 = math.tanh %29 : vector<8x1xf32>
    %c0_20 = arith.constant 0 : index
    %c0_21 = arith.constant 0 : index
    %31 = vector.load %arg9[%c0_20, %c0_21] : memref<8x1xf32, #tpu.memory_space<vmem>>, vector<8x1xf32>
    tpu.vector_store %arg9[%c0_20, %c0_21], %30 {strides = array<i32>} : memref<8x1xf32, #tpu.memory_space<vmem>>, vector<8x1xf32>,
    return
  }
  func.func @transform_0(%arg0: i32) -> (i32, i32) {
    %c0_i32 = arith.constant 0 : i32
    %c0_i32_0 = arith.constant 0 : i32
    return %arg0, %c0_i32 : i32, i32
  }
  func.func @transform_1(%arg0: i32) -> (i32, i32) {
    %c0_i32 = arith.constant 0 : i32
    %c0_i32_0 = arith.constant 0 : i32
    %c0_i32_1 = arith.constant 0 : i32
    return %c0_i32, %c0_i32_0 : i32, i32
  }
  func.func @transform_2(%arg0: i32) -> (i32, i32) {
    %c0_i32 = arith.constant 0 : i32
    %c0_i32_0 = arith.constant 0 : i32
    %c0_i32_1 = arith.constant 0 : i32
    return %c0_i32, %c0_i32_0 : i32, i32
  }
  func.func @transform_3(%arg0: i32) -> (i32, i32) {
    %c0_i32 = arith.constant 0 : i32
    %c0_i32_0 = arith.constant 0 : i32
    %c0_i32_1 = arith.constant 0 : i32
    return %c0_i32, %c0_i32_0 : i32, i32
  }
  func.func @transform_4(%arg0: i32) -> (i32, i32) {
    %c0_i32 = arith.constant 0 : i32
    %c0_i32_0 = arith.constant 0 : i32
    %c0_i32_1 = arith.constant 0 : i32
    return %c0_i32, %c0_i32_0 : i32, i32
  }
  func.func @transform_5(%arg0: i32) -> (i32, i32) {
    %c0_i32 = arith.constant 0 : i32
    %c0_i32_0 = arith.constant 0 : i32
    %c0_i32_1 = arith.constant 0 : i32
    return %c0_i32, %c0_i32_0 : i32, i32
  }
  func.func @transform_6(%arg0: i32) -> (i32, i32) {
    %c0_i32 = arith.constant 0 : i32
    %c0_i32_0 = arith.constant 0 : i32
    %c0_i32_1 = arith.constant 0 : i32
    return %c0_i32, %c0_i32_0 : i32, i32
  }
  func.func @transform_7(%arg0: i32) -> i32 {
    %c0_i32 = arith.constant 0 : i32
    %c0_i32_0 = arith.constant 0 : i32
    return %c0_i32 : i32
  }
  func.func @transform_8(%arg0: i32) -> (i32, i32) {
    %c0_i32 = arith.constant 0 : i32
    %c0_i32_0 = arith.constant 0 : i32
    return %arg0, %c0_i32 : i32, i32
  }
}

</mosaic_0001>

<llo_original>
// kernel: tpu_custom_call.1
$region0: #{tpu_custom_call.1}
  #allocation0 [shape = 'u32[]', space=smem, size = 0x4, offset = 0x4, fixed_abs, tag = 'smem constant byte address 0x4 - core index']
  #allocation1 [shape = 'u32[72,128]{1,0:T(1,128)}', space=vmem, size = 0x9000, scoped, tag = 'internal scratch']
  %s0 = inlined_call_operand.hbm [shape: f32[2,256], index: 0, kind: input, shape index: {}]
  %s1 = inlined_call_operand.vmem [shape: f32[256,64], index: 1, kind: input, shape index: {}]
  %s2 = inlined_call_operand.vmem [shape: f32[64,256], index: 2, kind: input, shape index: {}]
  %s3 = inlined_call_operand.vmem [shape: f32[1,256], index: 3, kind: input, shape index: {}]
  %s4 = inlined_call_operand.vmem [shape: f32[256,128], index: 4, kind: input, shape index: {}]
  %s5 = inlined_call_operand.vmem [shape: f32[1,128], index: 5, kind: input, shape index: {}]
  %s6 = inlined_call_operand.vmem [shape: f32[1,128], index: 6, kind: input, shape index: {}]
  %s7 = inlined_call_operand.hbm [shape: f32[2], index: 7, kind: input, shape index: {}]
  %s8 = inlined_call_operand.vmem [shape: f32[2,1], index: 8, kind: output, shape index: {}]
  %s9 = sld [smem:[#allocation0]]
  $region80: #{tpu_custom_call.1} parent=0
    _
  %s11 = ssub.s32 1, %s9
  %s12 = scalar_select 0, %s11, %s9
  $region1: #{tpu_custom_call.1} parent=0
    #allocation2 [shape = 'u8[8192]{0}', space=vmem, size = 0x2000, scoped, tag = 'input window, operand 0, single buffered']
    #allocation3 [shape = 's32[1]{0}', space=sflag, size = 0x4, scoped, tag = 'scoped memory for tpu_custom_call.1']
    #allocation4 [shape = 's32[1]{0}', space=sflag, size = 0x4, scoped, tag = 'scoped memory for tpu_custom_call.1']
    #allocation5 [shape = 'u8[512]{0}', space=smem, size = 0x200, scoped, tag = 'input window, operand 7, single buffered']
    #allocation6 [shape = 'u8[4096]{0}', space=vmem, size = 0x1000, scoped, tag = 'output window, operand 0, single buffered']
    %13 = vsyncpa [#allocation3], 0
    %14 = vsyncpa [#allocation4], 0
    // Predicated region
    $region2: #{tpu_custom_call.1} parent=1 // pred_check
      _
    $region3: #{tpu_custom_call.1} parent=1 // pred_check_branch
      %16 = sbr.rel (0) target = $region5
    $region4: #{tpu_custom_call.1} parent=1 // pred_region
      %18 = vsyncadd [#allocation3], 192
      %s19 = sshll.u32 %s0, 4
      %s20 = int_to_ptr.hbm [resolvable:$true] %s19
      %s21 = sshll.u32 [#allocation2], 4
      %s22 = int_to_ptr.vmem [resolvable:$true] %s21
      %27 = dma.hbm_to_vmem [thread:$0]  %s20, 64, %s22, [#allocation3], 64, 64, 4
    $region5: #{tpu_custom_call.1} parent=1 // pred_fallthru
      _
    // Predicated region
    $region6: #{tpu_custom_call.1} parent=1 // pred_check
      _
    $region7: #{tpu_custom_call.1} parent=1 // pred_check_branch
      %29 = sbr.rel (0) target = $region9
    $region8: #{tpu_custom_call.1} parent=1 // pred_region
      _
    $region9: #{tpu_custom_call.1} parent=1 // pred_fallthru
      _
    // Predicated region
    $region10: #{tpu_custom_call.1} parent=1 // pred_check
      _
    $region11: #{tpu_custom_call.1} parent=1 // pred_check_branch
      %31 = sbr.rel (0) target = $region13
    $region12: #{tpu_custom_call.1} parent=1 // pred_region
      _
    $region13: #{tpu_custom_call.1} parent=1 // pred_fallthru
      _
    // Predicated region
    $region14: #{tpu_custom_call.1} parent=1 // pred_check
      _
    $region15: #{tpu_custom_call.1} parent=1 // pred_check_branch
      %33 = sbr.rel (0) target = $region17
    $region16: #{tpu_custom_call.1} parent=1 // pred_region
      _
    $region17: #{tpu_custom_call.1} parent=1 // pred_fallthru
      _
    // Predicated region
    $region18: #{tpu_custom_call.1} parent=1 // pred_check
      _
    $region19: #{tpu_custom_call.1} parent=1 // pred_check_branch
      %35 = sbr.rel (0) target = $region21
    $region20: #{tpu_custom_call.1} parent=1 // pred_region
      _
    $region21: #{tpu_custom_call.1} parent=1 // pred_fallthru
      _
    // Predicated region
    $region22: #{tpu_custom_call.1} parent=1 // pred_check
      _
    $region23: #{tpu_custom_call.1} parent=1 // pred_check_branch
      %37 = sbr.rel (0) target = $region25
    $region24: #{tpu_custom_call.1} parent=1 // pred_region
      _
    $region25: #{tpu_custom_call.1} parent=1 // pred_fallthru
      _
    // Predicated region
    $region26: #{tpu_custom_call.1} parent=1 // pred_check
      _
    $region27: #{tpu_custom_call.1} parent=1 // pred_check_branch
      %39 = sbr.rel (0) target = $region29
    $region28: #{tpu_custom_call.1} parent=1 // pred_region
      _
    $region29: #{tpu_custom_call.1} parent=1 // pred_fallthru
      _
    // Predicated region
    $region30: #{tpu_custom_call.1} parent=1 // pred_check
      _
    $region31: #{tpu_custom_call.1} parent=1 // pred_check_branch
      %41 = sbr.rel (0) target = $region33
    $region32: #{tpu_custom_call.1} parent=1 // pred_region
      %43 = vsyncadd [#allocation4], 0
      %s45 = sshll.u32 %s7, 4
      %s46 = int_to_ptr.hbm [resolvable:$true] %s45
      %48 = dma.hbm_to_smem %s46, 16, [#allocation5], [#allocation4]
    $region33: #{tpu_custom_call.1} parent=1 // pred_fallthru
      _
    // Predicated region
    $region34: #{tpu_custom_call.1} parent=1 // pred_check
      _
    $region35: #{tpu_custom_call.1} parent=1 // pred_check_branch
      %50 = sbr.rel (0) target = $region37
    $region36: #{tpu_custom_call.1} parent=1 // pred_region
      %52 = dma.done [#allocation3], 256
    $region37: #{tpu_custom_call.1} parent=1 // pred_fallthru
      _
    // Predicated region
    $region38: #{tpu_custom_call.1} parent=1 // pred_check
      _
    $region39: #{tpu_custom_call.1} parent=1 // pred_check_branch
      %54 = sbr.rel (0) target = $region41
    $region40: #{tpu_custom_call.1} parent=1 // pred_region
      %56 = dma.done [#allocation4], 16
    $region41: #{tpu_custom_call.1} parent=1 // pred_fallthru
      _
    %57 = sfence
    %s58 = sld [smem:[#allocation5]]
    %s59 = sld [smem:[#allocation5 + $0x1]]
    %v60 = vld [vmem:[#allocation2] sm:$0xf]
    %v61 = vld [vmem:[#allocation2 + $0x4] sm:$0xf]
    %v62 = vld [vmem:[#allocation2 + $0x8] sm:$0xf]
    %v63 = vld [vmem:[#allocation2 + $0xc] sm:$0xf]
    %v64 = vld [vmem:[%s1] sm:$0xff]
    %v65 = vld [vmem:[%s1 + $0x8] sm:$0xff]
    %v66 = vld [vmem:[%s1 + $0x10] sm:$0xff]
    %v67 = vld [vmem:[%s1 + $0x18] sm:$0xff]
    %v68 = vld [vmem:[%s1 + $0x20] sm:$0xff]
    %v69 = vld [vmem:[%s1 + $0x28] sm:$0xff]
    %v70 = vld [vmem:[%s1 + $0x30] sm:$0xff]
    %v71 = vld [vmem:[%s1 + $0x38] sm:$0xff]
    %v72 = vld [vmem:[%s1 + $0x40] sm:$0xff]
    %v73 = vld [vmem:[%s1 + $0x48] sm:$0xff]
    %v74 = vld [vmem:[%s1 + $0x50] sm:$0xff]
    %v75 = vld [vmem:[%s1 + $0x58] sm:$0xff]
    %v76 = vld [vmem:[%s1 + $0x60] sm:$0xff]
    %v77 = vld [vmem:[%s1 + $0x68] sm:$0xff]
    %v78 = vld [vmem:[%s1 + $0x70] sm:$0xff]
    %v79 = vld [vmem:[%s1 + $0x78] sm:$0xff]
    %v80 = vld [vmem:[%s1 + $0x80] sm:$0xff]
    %v81 = vld [vmem:[%s1 + $0x88] sm:$0xff]
    %v82 = vld [vmem:[%s1 + $0x90] sm:$0xff]
    %v83 = vld [vmem:[%s1 + $0x98] sm:$0xff]
    %v84 = vld [vmem:[%s1 + $0xa0] sm:$0xff]
    %v85 = vld [vmem:[%s1 + $0xa8] sm:$0xff]
    %v86 = vld [vmem:[%s1 + $0xb0] sm:$0xff]
    %v87 = vld [vmem:[%s1 + $0xb8] sm:$0xff]
    %v88 = vld [vmem:[%s1 + $0xc0] sm:$0xff]
    %v89 = vld [vmem:[%s1 + $0xc8] sm:$0xff]
    %v90 = vld [vmem:[%s1 + $0xd0] sm:$0xff]
    %v91 = vld [vmem:[%s1 + $0xd8] sm:$0xff]
    %v92 = vld [vmem:[%s1 + $0xe0] sm:$0xff]
    %v93 = vld [vmem:[%s1 + $0xe8] sm:$0xff]
    %v94 = vld [vmem:[%s1 + $0xf0] sm:$0xff]
    %v95 = vld [vmem:[%s1 + $0xf8] sm:$0xff]
    %v96 = vstv %s58
    %101 = vst [vmem:[#allocation1] ss:$4 sm:$0xff] %v60
    %s102 = scalar_lea.vmem [#allocation1], 1
    %103 = vst [vmem:[%s102] ss:$4 sm:$0xff] %v61
    %s104 = scalar_lea.vmem [#allocation1], 2
    %105 = vst [vmem:[%s104] ss:$4 sm:$0xff] %v62
    %s106 = scalar_lea.vmem [#allocation1], 3
    %107 = vst [vmem:[%s106] ss:$4 sm:$0xff] %v63
    %v108 = vld.sshfl [vmem:[#allocation1] sm:$0xff pattern:$0x73625140]
    %v109 = vld.sshfl [vmem:[#allocation1 + $0x8] sm:$0xff pattern:$0x73625140]
    %112 = vmatpush.msra.mxu0 %v79
    %113 = vmatpush.msra.mxu0 %v78
    %114 = vmatpush.msra.mxu0 %v77
    %115 = vmatpush.msra.mxu0 %v76
    %116 = vmatpush.msra.mxu0 %v75
    %117 = vmatpush.msra.mxu0 %v74
    %118 = vmatpush.msra.mxu0 %v73
    %119 = vmatpush.msra.mxu0 %v72
    %120 = vmatpush.msra.mxu0 %v71
    %121 = vmatpush.msra.mxu0 %v70
    %122 = vmatpush.msra.mxu0 %v69
    %123 = vmatpush.msra.mxu0 %v68
    %124 = vmatpush.msra.mxu0 %v67
    %125 = vmatpush.msra.mxu0 %v66
    %126 = vmatpush.msra.mxu0 %v65
    %127 = vmatpush.msra.mxu0 %v64
    %128 = vmatmul.f32.gmra.mxu0 %v108
    %v129 = vpop.f32.mrf.mxu0
    %v130 = vadd.f32 %v96, %v129
    %131 = vdwg.mxu0
    %132 = vmatpush.msra.mxu0 %v95
    %133 = vmatpush.msra.mxu0 %v94
    %134 = vmatpush.msra.mxu0 %v93
    %135 = vmatpush.msra.mxu0 %v92
    %136 = vmatpush.msra.mxu0 %v91
    %137 = vmatpush.msra.mxu0 %v90
    %138 = vmatpush.msra.mxu0 %v89
    %139 = vmatpush.msra.mxu0 %v88
    %140 = vmatpush.msra.mxu0 %v87
    %141 = vmatpush.msra.mxu0 %v86
    %142 = vmatpush.msra.mxu0 %v85
    %143 = vmatpush.msra.mxu0 %v84
    %144 = vmatpush.msra.mxu0 %v83
    %145 = vmatpush.msra.mxu0 %v82
    %146 = vmatpush.msra.mxu0 %v81
    %147 = vmatpush.msra.mxu0 %v80
    %148 = vmatmul.f32.gmra.mxu0 %v109
    %v149 = vpop.f32.mrf.mxu0
    %v150 = vadd.f32 %v130, %v149
    %151 = vdwg.mxu0
    %v152 = vmax.f32 %v150, 0.0
    %v153 = vld [vmem:[%s2] sm:$0xff]
    %v154 = vld [vmem:[%s2 + $0x8] sm:$0xff]
    %v155 = vld [vmem:[%s2 + $0x10] sm:$0xff]
    %v156 = vld [vmem:[%s2 + $0x18] sm:$0xff]
    %v157 = vld [vmem:[%s2 + $0x20] sm:$0xff]
    %v158 = vld [vmem:[%s2 + $0x28] sm:$0xff]
    %v159 = vld [vmem:[%s2 + $0x30] sm:$0xff]
    %v160 = vld [vmem:[%s2 + $0x38] sm:$0xff]
    %v161 = vld [vmem:[%s2 + $0x40] sm:$0xff]
    %v162 = vld [vmem:[%s2 + $0x48] sm:$0xff]
    %v163 = vld [vmem:[%s2 + $0x50] sm:$0xff]
    %v164 = vld [vmem:[%s2 + $0x58] sm:$0xff]
    %v165 = vld [vmem:[%s2 + $0x60] sm:$0xff]
    %v166 = vld [vmem:[%s2 + $0x68] sm:$0xff]
    %v167 = vld [vmem:[%s2 + $0x70] sm:$0xff]
    %v168 = vld [vmem:[%s2 + $0x78] sm:$0xff]
    %v169 = vld [vmem:[%s3] sm:$0x3]
    %v171 = vperm.slane %v169, 0
    %v172 = vperm.slane %v169, 1
    %vm175 = vcmask 523264
    %v177 = vsel %vm175, %v152, 0
    %179 = vmatpush.msra.mxu0 0.0
    %180 = vmatpush.msra.mxu0 0.0
    %181 = vmatpush.msra.mxu0 0.0
    %182 = vmatpush.msra.mxu0 0.0
    %183 = vmatpush.msra.mxu0 0.0
    %184 = vmatpush.msra.mxu0 0.0
    %185 = vmatpush.msra.mxu0 0.0
    %186 = vmatpush.msra.mxu0 0.0
    %187 = vmatpush.msra.mxu0 %v167
    %188 = vmatpush.msra.mxu0 %v165
    %189 = vmatpush.msra.mxu0 %v163
    %190 = vmatpush.msra.mxu0 %v161
    %191 = vmatpush.msra.mxu0 %v159
    %192 = vmatpush.msra.mxu0 %v157
    %193 = vmatpush.msra.mxu0 %v155
    %194 = vmatpush.msra.mxu0 %v153
    %195 = vmatmul.f32.gmra.mxu0 %v177
    %v196 = vpop.f32.mrf.mxu0
    %v197 = vadd.f32 %v171, %v196
    %198 = vdwg.mxu0
    %199 = vmatpush.msra.mxu0 0.0
    %200 = vmatpush.msra.mxu0 0.0
    %201 = vmatpush.msra.mxu0 0.0
    %202 = vmatpush.msra.mxu0 0.0
    %203 = vmatpush.msra.mxu0 0.0
    %204 = vmatpush.msra.mxu0 0.0
    %205 = vmatpush.msra.mxu0 0.0
    %206 = vmatpush.msra.mxu0 0.0
    %207 = vmatpush.msra.mxu0 %v168
    %208 = vmatpush.msra.mxu0 %v166
    %209 = vmatpush.msra.mxu0 %v164
    %210 = vmatpush.msra.mxu0 %v162
    %211 = vmatpush.msra.mxu0 %v160
    %212 = vmatpush.msra.mxu0 %v158
    %213 = vmatpush.msra.mxu0 %v156
    %214 = vmatpush.msra.mxu0 %v154
    %215 = vmatmul.f32.gmra.mxu0 %v177
    %v216 = vpop.f32.mrf.mxu0
    %v217 = vadd.f32 %v172, %v216
    %218 = vdwg.mxu0
    %v219 = vmax.f32 %v197, 0.0
    %v220 = vmax.f32 %v217, 0.0
    %v221 = vld [vmem:[%s4] sm:$0xff]
    %v222 = vld [vmem:[%s4 + $0x8] sm:$0xff]
    %v223 = vld [vmem:[%s4 + $0x10] sm:$0xff]
    %v224 = vld [vmem:[%s4 + $0x18] sm:$0xff]
    %v225 = vld [vmem:[%s4 + $0x20] sm:$0xff]
    %v226 = vld [vmem:[%s4 + $0x28] sm:$0xff]
    %v227 = vld [vmem:[%s4 + $0x30] sm:$0xff]
    %v228 = vld [vmem:[%s4 + $0x38] sm:$0xff]
    %v229 = vld [vmem:[%s4 + $0x40] sm:$0xff]
    %v230 = vld [vmem:[%s4 + $0x48] sm:$0xff]
    %v231 = vld [vmem:[%s4 + $0x50] sm:$0xff]
    %v232 = vld [vmem:[%s4 + $0x58] sm:$0xff]
    %v233 = vld [vmem:[%s4 + $0x60] sm:$0xff]
    %v234 = vld [vmem:[%s4 + $0x68] sm:$0xff]
    %v235 = vld [vmem:[%s4 + $0x70] sm:$0xff]
    %v236 = vld [vmem:[%s4 + $0x78] sm:$0xff]
    %v237 = vld [vmem:[%s4 + $0x80] sm:$0xff]
    %v238 = vld [vmem:[%s4 + $0x88] sm:$0xff]
    %v239 = vld [vmem:[%s4 + $0x90] sm:$0xff]
    %v240 = vld [vmem:[%s4 + $0x98] sm:$0xff]
    %v241 = vld [vmem:[%s4 + $0xa0] sm:$0xff]
    %v242 = vld [vmem:[%s4 + $0xa8] sm:$0xff]
    %v243 = vld [vmem:[%s4 + $0xb0] sm:$0xff]
    %v244 = vld [vmem:[%s4 + $0xb8] sm:$0xff]
    %v245 = vld [vmem:[%s4 + $0xc0] sm:$0xff]
    %v246 = vld [vmem:[%s4 + $0xc8] sm:$0xff]
    %v247 = vld [vmem:[%s4 + $0xd0] sm:$0xff]
    %v248 = vld [vmem:[%s4 + $0xd8] sm:$0xff]
    %v249 = vld [vmem:[%s4 + $0xe0] sm:$0xff]
    %v250 = vld [vmem:[%s4 + $0xe8] sm:$0xff]
    %v251 = vld [vmem:[%s4 + $0xf0] sm:$0xff]
    %v252 = vld [vmem:[%s4 + $0xf8] sm:$0xff]
    %v253 = vld [vmem:[%s5] sm:$0x1]
    %v255 = vperm.slane %v253, 0
    %257 = vmatpush.msra.mxu0 %v236
    %258 = vmatpush.msra.mxu0 %v235
    %259 = vmatpush.msra.mxu0 %v234
    %260 = vmatpush.msra.mxu0 %v233
    %261 = vmatpush.msra.mxu0 %v232
    %262 = vmatpush.msra.mxu0 %v231
    %263 = vmatpush.msra.mxu0 %v230
    %264 = vmatpush.msra.mxu0 %v229
    %265 = vmatpush.msra.mxu0 %v228
    %266 = vmatpush.msra.mxu0 %v227
    %267 = vmatpush.msra.mxu0 %v226
    %268 = vmatpush.msra.mxu0 %v225
    %269 = vmatpush.msra.mxu0 %v224
    %270 = vmatpush.msra.mxu0 %v223
    %271 = vmatpush.msra.mxu0 %v222
    %272 = vmatpush.msra.mxu0 %v221
    %273 = vmatmul.f32.gmra.mxu0 %v219
    %v274 = vpop.f32.mrf.mxu0
    %v275 = vadd.f32 %v255, %v274
    %276 = vdwg.mxu0
    %277 = vmatpush.msra.mxu0 %v252
    %278 = vmatpush.msra.mxu0 %v251
    %279 = vmatpush.msra.mxu0 %v250
    %280 = vmatpush.msra.mxu0 %v249
    %281 = vmatpush.msra.mxu0 %v248
    %282 = vmatpush.msra.mxu0 %v247
    %283 = vmatpush.msra.mxu0 %v246
    %284 = vmatpush.msra.mxu0 %v245
    %285 = vmatpush.msra.mxu0 %v244
    %286 = vmatpush.msra.mxu0 %v243
    %287 = vmatpush.msra.mxu0 %v242
    %288 = vmatpush.msra.mxu0 %v241
    %289 = vmatpush.msra.mxu0 %v240
    %290 = vmatpush.msra.mxu0 %v239
    %291 = vmatpush.msra.mxu0 %v238
    %292 = vmatpush.msra.mxu0 %v237
    %293 = vmatmul.f32.gmra.mxu0 %v220
    %v294 = vpop.f32.mrf.mxu0
    %v295 = vadd.f32 %v275, %v294
    %296 = vdwg.mxu0
    %v297 = vmax.f32 %v295, 0.0
    %v298 = vld [vmem:[%s6] sm:$0x1]
    %v300 = vperm.slane %v298, 0
    %v302 = vmul.f32 %v297, %v300
    %303 = vadd.xlane.f32.xlu0 %v302
    %v304 = vpop.xlane.xlu0 %303
    %v305 = vstv %s59
    %v306 = vadd.f32 %v304, %v305
    %v307 = vtanh.pop %v306
    %vm308 = vcmask 7168
    %309 = vst.msk [vmem:[#allocation6] sm:$0xff] %vm308, %v307
    // Predicated region
    $region42: #{tpu_custom_call.1} parent=1 // pred_check
      _
    $region43: #{tpu_custom_call.1} parent=1 // pred_check_branch
      %311 = sbr.rel (0) target = $region45
    $region44: #{tpu_custom_call.1} parent=1 // pred_region
      // Predicated region
      $region46: #{tpu_custom_call.1} parent=44 // pred_check
        _
      $region47: #{tpu_custom_call.1} parent=44 // pred_check_branch
        %313 = sbr.rel (0) target = $region49
      $region48: #{tpu_custom_call.1} parent=44 // pred_region
        // Predicated region
        $region50: #{tpu_custom_call.1} parent=48 // pred_check
          _
        $region51: #{tpu_custom_call.1} parent=48 // pred_check_branch
          %315 = sbr.rel target = $region53
        $region52: #{tpu_custom_call.1} parent=48 // pred_region
          // Predicated region
          $region65: #{tpu_custom_call.1} parent=52 // pred_check
            _
          $region66: #{tpu_custom_call.1} parent=52 // pred_check_branch
            %331 = sbr.rel (0) target = $region68
          $region67: #{tpu_custom_call.1} parent=52 // pred_region
            %s333 = ssub.s32 4, 1
            loop: start=0, step=1, limit=1
            $region69: #{tpu_custom_call.1} parent=67 // loop_pre_header
              _
            $region70: #{tpu_custom_call.1} parent=67 // loop_header
              %s335 = sphi 0, %s339
              %p336 = scmp.ge.s32.totalorder %s335, 1
              %s340 = sphi [#allocation6], [#allocation6]
              %s341 = sphi %s8, %s8
            $region71: #{tpu_custom_call.1} parent=67 // loop_header_branch
              %338 = sbr.rel (%p336) target = $region75
            $region72: #{tpu_custom_call.1} parent=67 // loop_body
              %v342 = vld [vmem:[%s340] sm:%s333]
              %343 = vst [vmem:[%s341] sm:%s333] %v342
            $region73: #{tpu_custom_call.1} parent=67 // loop_footer
              %s339 = sadd.s32 1, %s335
            $region74: #{tpu_custom_call.1} parent=67 // loop_footer_branch
              %334 = sbr.rel target = $region70
            $region75: #{tpu_custom_call.1} parent=67 // loop_exit
              _
          $region68: #{tpu_custom_call.1} parent=52 // pred_fallthru
            _
        $region53: #{tpu_custom_call.1} parent=48 // pred_fallthru
          _
        // Predicated region
        $region54: #{tpu_custom_call.1} parent=48 // pred_check
          _
        $region55: #{tpu_custom_call.1} parent=48 // pred_check_branch
          %317 = sbr.rel (0) target = $region57
        $region56: #{tpu_custom_call.1} parent=48 // pred_region
          %s319 = ssub.s32 4, 1
          loop: start=0, step=1, limit=1
          $region58: #{tpu_custom_call.1} parent=56 // loop_pre_header
            _
          $region59: #{tpu_custom_call.1} parent=56 // loop_header
            %s321 = sphi 0, %s325
            %p322 = scmp.ge.s32.totalorder %s321, 1
            %s326 = sphi [#allocation6], [#allocation6]
            %s327 = sphi %s8, %s8
          $region60: #{tpu_custom_call.1} parent=56 // loop_header_branch
            %324 = sbr.rel (%p322) target = $region64
          $region61: #{tpu_custom_call.1} parent=56 // loop_body
            %v328 = vld [vmem:[%s326] sm:%s319]
            %329 = vst [vmem:[%s327] sm:%s319] %v328
          $region62: #{tpu_custom_call.1} parent=56 // loop_footer
            %s325 = sadd.s32 1, %s321
          $region63: #{tpu_custom_call.1} parent=56 // loop_footer_branch
            %320 = sbr.rel target = $region59
          $region64: #{tpu_custom_call.1} parent=56 // loop_exit
            _
        $region57: #{tpu_custom_call.1} parent=48 // pred_fallthru
          _
      $region49: #{tpu_custom_call.1} parent=44 // pred_fallthru
        _
      %344 = vnop
    $region45: #{tpu_custom_call.1} parent=1 // pred_fallthru
      _
    // Predicated region
    $region76: #{tpu_custom_call.1} parent=1 // pred_check
      _
    $region77: #{tpu_custom_call.1} parent=1 // pred_check_branch
      %346 = sbr.rel (0) target = $region79
    $region78: #{tpu_custom_call.1} parent=1 // pred_region
      _
    $region79: #{tpu_custom_call.1} parent=1 // pred_fallthru
      _
    %347 = vsyncpa [#allocation3], 1
    %348 = vsyncpa [#allocation4], 1

</llo_original>
